<compile_context>
chip_gen: v5e
topology: v5e:2x2
jax: 0.10.0
libtpu: 0.0.40
codegen_flags: <defaults>
</compile_context>

<pallas_src>
import jax
import jax.numpy as jnp
from jax.experimental import pallas as pl
from jax.experimental.pallas import tpu as pltpu


def _round_up(n, m):
    return ((n + m - 1) // m) * m


def continue_model_kernel(xT_ref, w1T_ref, b1_ref, w2_ref, b2_ref, o_ref):
    # Layer 1 on the MXU with batch on the lane axis:
    #   (H, in) @ (in, TB) -> (H, TB), f32 accumulation.
    h = jnp.dot(w1T_ref[...], xT_ref[...], preferred_element_type=jnp.float32)
    h = jnp.maximum(h + b1_ref[...], 0.0)                     # b1 is (H, 1): lane-broadcast
    # Layer 2 (N=1): VPU broadcast-multiply + sublane (XLU) reduction keeps
    # the MXU free and produces a lane-dense (1, TB) result.
    out = jnp.sum(h * w2_ref[...], axis=0, keepdims=True)     # (1, TB)
    out = out + b2_ref[0, 0]                                  # scalar bias from SMEM
    o_ref[...] = out.astype(o_ref.dtype)


def continue_model(x, w1, b1, w2, b2, *, block_b=4096, cast_to_bf16=False):
    """x: [B, input_dim]; w1: [input_dim, hidden]; b1: [hidden]-like;
       w2: [hidden, 1]; b2: scalar-like  ->  logits: [B, 1]"""
    B, in_dim = x.shape
    hidden = w1.shape[1]

    # --- batch tiling: balanced, lane-aligned (multiple-of-128) tiles --------
    n_tiles = max(pl.cdiv(B, block_b), 1)
    if B > 512:
        n_tiles = max(n_tiles, 2)            # keep both v7x TensorCores busy
    tb = _round_up(pl.cdiv(B, n_tiles), 128)  # batch sits on the lane axis
    n_tiles = pl.cdiv(B, tb)
    b_pad = n_tiles * tb

    # --- layout plumbing: batch onto the lane axis ----------------------------
    x_t = jnp.pad(x, ((0, b_pad - B), (0, 0))).T   # (in_dim, b_pad); zero cols sliced off below
    w1_t = jnp.asarray(w1).T                       # (hidden, in_dim), VMEM-resident
    b1_col = b1.reshape(hidden, 1)
    w2_col = w2.reshape(hidden, 1)
    b2_s = b2.reshape(1, 1)

    if cast_to_bf16:
        # Halves the dominant x HBM stream; MXU accumulates in f32 regardless.
        x_t = x_t.astype(jnp.bfloat16)
        w1_t = w1_t.astype(jnp.bfloat16)

    cost = pl.CostEstimate(
        flops=2 * b_pad * in_dim * hidden + 3 * b_pad * hidden,
        transcendentals=0,
        bytes_accessed=(x_t.size * x_t.dtype.itemsize
                        + w1_t.size * w1_t.dtype.itemsize
                        + (b1_col.size + w2_col.size + b2_s.size + b_pad) * 4),
    )

    out = pl.pallas_call(
        continue_model_kernel,
        out_shape=jax.ShapeDtypeStruct((1, b_pad), jnp.float32),
        grid=(n_tiles,),
        in_specs=[
            pl.BlockSpec((in_dim, tb), lambda i: (0, i)),       # x.T: tiled, double-buffered
            pl.BlockSpec((hidden, in_dim), lambda i: (0, 0)),   # w1.T: VMEM-resident
            pl.BlockSpec((hidden, 1), lambda i: (0, 0)),        # b1 column: VMEM-resident
            pl.BlockSpec((hidden, 1), lambda i: (0, 0)),        # w2 column: VMEM-resident
            pl.BlockSpec(memory_space=pltpu.MemorySpace.SMEM),  # b2: scalar in SMEM
        ],
        out_specs=pl.BlockSpec((1, tb), lambda i: (0, i)),      # lane-dense output slab
        compiler_params=pltpu.CompilerParams(
            dimension_semantics=("parallel",)),                 # shard batch tiles across TCs
        cost_estimate=cost,
    )(x_t, w1_t, b1_col, w2_col, b2_s)

    return out[0, :B].reshape(B, 1).astype(x.dtype)


def continue_model_ref(x, w1, b1, w2, b2):
    h = jnp.maximum(x @ w1 + b1.reshape(1, -1), 0.0)
    return h @ w2 + b2.reshape(1, 1)


if __name__ == "__main__":
    # Small shapes consistent with the module; B=13 exercises the padded tail.
    B, input_dim, hidden_dim = 13, 32, 32

    key = jax.random.PRNGKey(0)
    kx, kw1, kb1, kw2, kb2 = jax.random.split(key, 5)

    # nn.Linear-like init scale: U(-1/sqrt(fan_in), 1/sqrt(fan_in)); weights stored
    # pre-transposed as [in, out] so the wrapper's .T matches PyTorch's layout.
    lim1 = 1.0 / (input_dim ** 0.5)
    lim2 = 1.0 / (hidden_dim ** 0.5)
    w1 = jax.random.uniform(kw1, (input_dim, hidden_dim), jnp.float32, -lim1, lim1)
    b1 = jax.random.uniform(kb1, (hidden_dim,), jnp.float32, -lim1, lim1)
    w2 = jax.random.uniform(kw2, (hidden_dim, 1), jnp.float32, -lim2, lim2)
    b2 = jax.random.uniform(kb2, (1,), jnp.float32, -lim2, lim2)

    x = jax.random.normal(kx, (B, input_dim), jnp.float32)

    logits = continue_model(x, w1, b1, w2, b2)
    logits = jax.block_until_ready(logits)

    ref = continue_model_ref(x, w1, b1, w2, b2)
    assert logits.shape == (B, 1)
    assert jnp.allclose(logits, ref, atol=1e-5, rtol=1e-5), \
        float(jnp.max(jnp.abs(logits - ref)))

    print("KERNEL_OK")
</pallas_src>

<mosaic_0001>
module attributes {stable_mosaic.version = 11 : i64} {
  func.func @continue_model_kernel(%arg0: i32, %arg1: memref<32x128xf32, #tpu.memory_space<vmem>>, %arg2: memref<32x32xf32, #tpu.memory_space<vmem>>, %arg3: memref<32x1xf32, #tpu.memory_space<vmem>>, %arg4: memref<32x1xf32, #tpu.memory_space<vmem>>, %arg5: memref<1x1xf32, #tpu.memory_space<smem>>, %arg6: memref<1x128xf32, #tpu.memory_space<vmem>>) attributes {dimension_semantics = [#tpu.dimension_semantics<parallel>], iteration_bounds = array<i64: 1>, scalar_prefetch = 0 : i64, scratch_operands = 0 : i64, tpu.core_type = #tpu.core_type<tc>, window_params = [{transform_indices = @transform_0, window_bounds = array<i64: 32, 128>}, {pipeline_mode = #tpu.pipeline_mode<synchronous>, transform_indices = @transform_1, window_bounds = array<i64: 32, 32>}, {pipeline_mode = #tpu.pipeline_mode<synchronous>, transform_indices = @transform_2, window_bounds = array<i64: 32, 1>}, {pipeline_mode = #tpu.pipeline_mode<synchronous>, transform_indices = @transform_3, window_bounds = array<i64: 32, 1>}, {transform_indices = @transform_4, window_bounds = array<i64: 1, 1>}, {transform_indices = @transform_5, window_bounds = array<i64: 1, 128>}]} {
    %c0 = arith.constant 0 : index
    %c0_0 = arith.constant 0 : index
    %0 = vector.load %arg2[%c0, %c0_0] : memref<32x32xf32, #tpu.memory_space<vmem>>, vector<32x32xf32>
    %c0_1 = arith.constant 0 : index
    %c0_2 = arith.constant 0 : index
    %1 = vector.load %arg1[%c0_1, %c0_2] : memref<32x128xf32, #tpu.memory_space<vmem>>, vector<32x128xf32>
    %cst = arith.constant dense<0.000000e+00> : vector<32x128xf32>
    %2 = tpu.matmul %0, %1, %cst {dimension_numbers = #tpu.dot_dimension_numbers<[1], [0], [0], [1], [0, 0, 1, 1], [], []>} : vector<32x32xf32>, vector<32x128xf32>, vector<32x128xf32> -> vector<32x128xf32>
    %c0_3 = arith.constant 0 : index
    %c0_4 = arith.constant 0 : index
    %3 = vector.load %arg3[%c0_3, %c0_4] : memref<32x1xf32, #tpu.memory_space<vmem>>, vector<32x1xf32>
    %4 = vector.broadcast %3 : vector<32x1xf32> to vector<32x128xf32>
    %5 = arith.addf %2, %4 : vector<32x128xf32>
    %cst_5 = arith.constant 0.000000e+00 : f32
    %6 = vector.broadcast %cst_5 : f32 to vector<32x128xf32>
    %7 = arith.maximumf %5, %6 : vector<32x128xf32>
    %c0_6 = arith.constant 0 : index
    %c0_7 = arith.constant 0 : index
    %8 = vector.load %arg4[%c0_6, %c0_7] : memref<32x1xf32, #tpu.memory_space<vmem>>, vector<32x1xf32>
    %9 = vector.broadcast %8 : vector<32x1xf32> to vector<32x128xf32>
    %10 = arith.mulf %7, %9 : vector<32x128xf32>
    %cst_8 = arith.constant dense<0.000000e+00> : vector<128xf32>
    %11 = vector.multi_reduction <add>, %10, %cst_8 [0] : vector<32x128xf32> to vector<128xf32>
    %12 = vector.shape_cast %11 : vector<128xf32> to vector<1x128xf32>
    %c0_9 = arith.constant 0 : index
    %c0_10 = arith.constant 0 : index
    %13 = memref.load %arg5[%c0_9, %c0_10] : memref<1x1xf32, #tpu.memory_space<smem>>
    %14 = vector.broadcast %13 : f32 to vector<1x128xf32>
    %15 = arith.addf %12, %14 : vector<1x128xf32>
    %c0_11 = arith.constant 0 : index
    %c0_12 = arith.constant 0 : index
    %16 = vector.load %arg6[%c0_11, %c0_12] : memref<1x128xf32, #tpu.memory_space<vmem>>, vector<1x128xf32>
    tpu.vector_store %arg6[%c0_11, %c0_12], %15 {strides = array<i32>} : memref<1x128xf32, #tpu.memory_space<vmem>>, vector<1x128xf32>,
    return
  }
  func.func @transform_0(%arg0: i32) -> (i32, i32) {
    %c0_i32 = arith.constant 0 : i32
    %c0_i32_0 = arith.constant 0 : i32
    return %c0_i32, %arg0 : i32, i32
  }
  func.func @transform_1(%arg0: i32) -> (i32, i32) {
    %c0_i32 = arith.constant 0 : i32
    %c0_i32_0 = arith.constant 0 : i32
    %c0_i32_1 = arith.constant 0 : i32
    return %c0_i32, %c0_i32_0 : i32, i32
  }
  func.func @transform_2(%arg0: i32) -> (i32, i32) {
    %c0_i32 = arith.constant 0 : i32
    %c0_i32_0 = arith.constant 0 : i32
    %c0_i32_1 = arith.constant 0 : i32
    return %c0_i32, %c0_i32_0 : i32, i32
  }
  func.func @transform_3(%arg0: i32) -> (i32, i32) {
    %c0_i32 = arith.constant 0 : i32
    %c0_i32_0 = arith.constant 0 : i32
    %c0_i32_1 = arith.constant 0 : i32
    return %c0_i32, %c0_i32_0 : i32, i32
  }
  func.func @transform_4(%arg0: i32) -> (i32, i32) {
    %c0_i32 = arith.constant 0 : i32
    %c0_i32_0 = arith.constant 0 : i32
    %c0_i32_1 = arith.constant 0 : i32
    return %c0_i32, %c0_i32_0 : i32, i32
  }
  func.func @transform_5(%arg0: i32) -> (i32, i32) {
    %c0_i32 = arith.constant 0 : i32
    %c0_i32_0 = arith.constant 0 : i32
    return %c0_i32, %arg0 : i32, i32
  }
}

</mosaic_0001>

<llo_original>
// kernel: tpu_custom_call.1
$region0: #{tpu_custom_call.1}
  #allocation0 [shape = 'u32[]', space=smem, size = 0x4, offset = 0x4, fixed_abs, tag = 'smem constant byte address 0x4 - core index']
  #allocation1 [shape = 'u32[72,128]{1,0:T(1,128)}', space=vmem, size = 0x9000, scoped, tag = 'internal scratch']
  #allocation2 [shape = 'f32[1,1]{1,0:T(1,128)S(6)}', space=smem, size = 0x200, scoped, tag = 'scoped memory for tpu_custom_call.1']
  %s0 = inlined_call_operand.vmem [shape: f32[32,128], index: 0, kind: input, shape index: {}]
  %s1 = inlined_call_operand.vmem [shape: f32[32,32], index: 1, kind: input, shape index: {}]
  %s2 = inlined_call_operand.vmem [shape: f32[32,1], index: 2, kind: input, shape index: {}]
  %s3 = inlined_call_operand.vmem [shape: f32[32,1], index: 3, kind: input, shape index: {}]
  %s4 = inlined_call_operand.<no memory space> [shape: f32[1,1], index: 4, kind: input, shape index: {}]
  %s5 = inlined_call_operand.hbm [shape: f32[1,128], index: 5, kind: output, shape index: {}]
  %s6 = sld [smem:[#allocation0]]
  $region30: #{tpu_custom_call.1} parent=0
    _
  %s8 = ssub.s32 1, %s6
  %s9 = scalar_select 0, %s8, %s6
  %10 = sst [smem:[#allocation2]] %s4
  $region1: #{tpu_custom_call.1} parent=0
    #allocation3 [shape = 'u8[512]{0}', space=vmem, size = 0x400, scoped, tag = 'output window, operand 0, single buffered']
    #allocation4 [shape = 's32[1]{0}', space=sflag, size = 0x4, scoped, tag = 'scoped memory for tpu_custom_call.1']
    %11 = vsyncpa [#allocation4], 0
    // Predicated region
    $region2: #{tpu_custom_call.1} parent=1 // pred_check
      _
    $region3: #{tpu_custom_call.1} parent=1 // pred_check_branch
      %13 = sbr.rel (0) target = $region5
    $region4: #{tpu_custom_call.1} parent=1 // pred_region
      _
    $region5: #{tpu_custom_call.1} parent=1 // pred_fallthru
      _
    // Predicated region
    $region6: #{tpu_custom_call.1} parent=1 // pred_check
      _
    $region7: #{tpu_custom_call.1} parent=1 // pred_check_branch
      %15 = sbr.rel (0) target = $region9
    $region8: #{tpu_custom_call.1} parent=1 // pred_region
      _
    $region9: #{tpu_custom_call.1} parent=1 // pred_fallthru
      _
    // Predicated region
    $region10: #{tpu_custom_call.1} parent=1 // pred_check
      _
    $region11: #{tpu_custom_call.1} parent=1 // pred_check_branch
      %17 = sbr.rel (0) target = $region13
    $region12: #{tpu_custom_call.1} parent=1 // pred_region
      _
    $region13: #{tpu_custom_call.1} parent=1 // pred_fallthru
      _
    // Predicated region
    $region14: #{tpu_custom_call.1} parent=1 // pred_check
      _
    $region15: #{tpu_custom_call.1} parent=1 // pred_check_branch
      %19 = sbr.rel (0) target = $region17
    $region16: #{tpu_custom_call.1} parent=1 // pred_region
      _
    $region17: #{tpu_custom_call.1} parent=1 // pred_fallthru
      _
    // Predicated region
    $region18: #{tpu_custom_call.1} parent=1 // pred_check
      _
    $region19: #{tpu_custom_call.1} parent=1 // pred_check_branch
      %21 = sbr.rel (0) target = $region21
    $region20: #{tpu_custom_call.1} parent=1 // pred_region
      _
    $region21: #{tpu_custom_call.1} parent=1 // pred_fallthru
      _
    %v22 = vld [vmem:[%s1] sm:$0xff]
    %v23 = vld [vmem:[%s1 + $0x8] sm:$0xff]
    %v24 = vld [vmem:[%s1 + $0x10] sm:$0xff]
    %v25 = vld [vmem:[%s1 + $0x18] sm:$0xff]
    %v26 = vld [vmem:[%s0] sm:$0xff]
    %v27 = vld [vmem:[%s0 + $0x8] sm:$0xff]
    %v28 = vld [vmem:[%s0 + $0x10] sm:$0xff]
    %v29 = vld [vmem:[%s0 + $0x18] sm:$0xff]
    %v30 = vld [vmem:[%s2] sm:$0xff]
    %v31 = vld [vmem:[%s2 + $0x8] sm:$0xff]
    %v32 = vld [vmem:[%s2 + $0x10] sm:$0xff]
    %v33 = vld [vmem:[%s2 + $0x18] sm:$0xff]
    %35 = vset.pattern.permute.xlu0 0
    %36 = vperm.xlu0 %35, %v30
    %v37 = vpop.permute.xlu0 %36
    %40 = vset.pattern.permute.xlu0 0
    %41 = vperm.xlu0 %40, %v31
    %v42 = vpop.permute.xlu0 %41
    %45 = vset.pattern.permute.xlu0 0
    %46 = vperm.xlu0 %45, %v32
    %v47 = vpop.permute.xlu0 %46
    %50 = vset.pattern.permute.xlu0 0
    %51 = vperm.xlu0 %50, %v33
    %v52 = vpop.permute.xlu0 %51
    %vm54 = vcmask 261120
    %v56 = vsel %vm54, %v22, 0
    %v59 = vsel %vm54, %v23, 0
    %v62 = vsel %vm54, %v24, 0
    %v65 = vsel %vm54, %v25, 0
    %67 = vmatpush.msra.mxu0 0.0
    %68 = vmatpush.msra.mxu0 0.0
    %69 = vmatpush.msra.mxu0 0.0
    %70 = vmatpush.msra.mxu0 0.0
    %71 = vmatpush.msra.mxu0 0.0
    %72 = vmatpush.msra.mxu0 0.0
    %73 = vmatpush.msra.mxu0 0.0
    %74 = vmatpush.msra.mxu0 0.0
    %75 = vmatpush.msra.mxu0 0.0
    %76 = vmatpush.msra.mxu0 0.0
    %77 = vmatpush.msra.mxu0 0.0
    %78 = vmatpush.msra.mxu0 0.0
    %79 = vmatpush.msra.mxu0 %v29
    %80 = vmatpush.msra.mxu0 %v28
    %81 = vmatpush.msra.mxu0 %v27
    %82 = vmatpush.msra.mxu0 %v26
    %83 = vmatmul.f32.gmra.mxu0 %v56
    %v84 = vpop.f32.mrf.mxu0
    %v85 = vadd.f32 %v37, %v84
    %86 = vmatmul.f32.gmra.mxu0 %v59
    %v87 = vpop.f32.mrf.mxu0
    %v88 = vadd.f32 %v42, %v87
    %89 = vmatmul.f32.gmra.mxu0 %v62
    %v90 = vpop.f32.mrf.mxu0
    %v91 = vadd.f32 %v47, %v90
    %92 = vmatmul.f32.gmra.mxu0 %v65
    %v93 = vpop.f32.mrf.mxu0
    %v94 = vadd.f32 %v52, %v93
    %95 = vdwg.mxu0
    %v96 = vmax.f32 %v85, 0.0
    %v97 = vmax.f32 %v88, 0.0
    %v98 = vmax.f32 %v91, 0.0
    %v99 = vmax.f32 %v94, 0.0
    %v100 = vld [vmem:[%s3] sm:$0xff]
    %v101 = vld [vmem:[%s3 + $0x8] sm:$0xff]
    %v102 = vld [vmem:[%s3 + $0x10] sm:$0xff]
    %v103 = vld [vmem:[%s3 + $0x18] sm:$0xff]
    %105 = vset.pattern.permute.xlu0 0
    %106 = vperm.xlu0 %105, %v100
    %v107 = vpop.permute.xlu0 %106
    %110 = vset.pattern.permute.xlu0 0
    %111 = vperm.xlu0 %110, %v101
    %v112 = vpop.permute.xlu0 %111
    %115 = vset.pattern.permute.xlu0 0
    %116 = vperm.xlu0 %115, %v102
    %v117 = vpop.permute.xlu0 %116
    %120 = vset.pattern.permute.xlu0 0
    %121 = vperm.xlu0 %120, %v103
    %v122 = vpop.permute.xlu0 %121
    %v124 = vmul.f32 %v96, %v107
    %v125 = vmul.f32 %v97, %v112
    %v126 = vmul.f32 %v98, %v117
    %v127 = vmul.f32 %v99, %v122
    %v128 = vadd.f32 %v124, %v125
    %v129 = vadd.f32 %v128, %v126
    %v130 = vadd.f32 %v129, %v127
    %v131 = vrot.slane %v130, 4
    %v132 = vadd.f32 %v130, %v131
    %v133 = vrot.slane %v132, 2
    %v134 = vadd.f32 %v132, %v133
    %v135 = vrot.slane %v134, 1
    %v136 = vadd.f32 %v134, %v135
    %s137 = sld [smem:[#allocation2]]
    %v138 = vstv %s137
    %v139 = vadd.f32 %v136, %v138
    %140 = vst [vmem:[#allocation3] sm:$0x1] %v139
    // Predicated region
    $region22: #{tpu_custom_call.1} parent=1 // pred_check
      _
    $region23: #{tpu_custom_call.1} parent=1 // pred_check_branch
      %142 = sbr.rel (0) target = $region25
    $region24: #{tpu_custom_call.1} parent=1 // pred_region
      %144 = vsyncadd [#allocation4], 0
      %s146 = sshll.u32 [#allocation3], 4
      %s147 = int_to_ptr.vmem [resolvable:$true] %s146
      %s148 = sshll.u32 %s5, 4
      %s149 = int_to_ptr.hbm [resolvable:$true] %s148
      %151 = dma.vmem_to_hbm [thread:$0]  %s147, 16, %s149, [#allocation4]
    $region25: #{tpu_custom_call.1} parent=1 // pred_fallthru
      _
    // Predicated region
    $region26: #{tpu_custom_call.1} parent=1 // pred_check
      _
    $region27: #{tpu_custom_call.1} parent=1 // pred_check_branch
      %153 = sbr.rel (0) target = $region29
    $region28: #{tpu_custom_call.1} parent=1 // pred_region
      %155 = dma.done [#allocation4], 16
    $region29: #{tpu_custom_call.1} parent=1 // pred_fallthru
      _
    %156 = vsyncpa [#allocation4], 1

</llo_original>
